<compile_context>
chip_gen: v7x
topology: tpu7x:2x2x1
jax: 0.10.0
libtpu: 0.0.40
codegen_flags: <defaults>
</compile_context>

<pallas_src>
import functools

import jax
import jax.numpy as jnp
import numpy as np
from jax.experimental import pallas as pl
from jax.experimental.pallas import tpu as pltpu


def ink_kernel(patches_ref, wconv_ref, bconv_ref, wcls_ref, bcls_ref,
               out_ref, acc_ref):
    """One grid step = one batch element (axis 0) x one patch-row tile (axis 1).

    patches_ref: (1, TP, K)  bf16 im2col patch tile for batch n
    wconv_ref:   (K, Cp)     bf16 stem conv weight (zero padded to Cp lanes)
    bconv_ref:   (1, Cp)     f32  stem conv bias   (zero padded)
    wcls_ref:    (1, Cp)     f32  classifier weight row, pre-scaled by 1/P
    bcls_ref:    (1,)        f32  classifier bias (SMEM scalar)
    out_ref:     (1, 1, 128) f32  lane-dense output block for batch n
    acc_ref:     (1, Cp)     f32  per-batch pooled-sum accumulator (VMEM scratch)
    """
    t = pl.program_id(1)
    n_tiles = pl.num_programs(1)

    @pl.when(t == 0)
    def _():
        acc_ref[...] = jnp.zeros_like(acc_ref)

    # Surrogate backbone hot path: bf16 MXU matmul, f32 accumulate.
    feat = jnp.dot(patches_ref[0], wconv_ref[...],
                   preferred_element_type=jnp.float32) + bconv_ref[...]
    feat = feat * jax.nn.sigmoid(feat)   # SiLU in f32 (v5e-safe); SiLU(0) = 0.

    # Global-average-pool contribution of this tile (1/P folded into wcls).
    acc_ref[...] += jnp.sum(feat, axis=0, keepdims=True)

    @pl.when(t == n_tiles - 1)
    def _():
        # Classifier head: VPU multiply + lane reduce (exact nn.Linear(C, 1)).
        logit = jnp.sum(acc_ref[...] * wcls_ref[...], axis=-1,
                        keepdims=True) + bcls_ref[0]
        prob = jax.nn.sigmoid(logit)                       # (1, 1)
        out_ref[...] = jnp.broadcast_to(prob.reshape(1, 1, 1), out_ref.shape)


def _pick_tile_rows(p, cap=512):
    """Largest multiple-of-16 divisor of p that is <= cap (falls back to p)."""
    best = 0
    for cand in range(16, min(p, cap) + 1, 16):
        if p % cand == 0:
            best = cand
    return best if best > 0 else p


def _im2col_3x3_s2(x_nchw):
    """NCHW -> (N, P, 9*Z) patches of a 3x3 / stride-2 / pad-1 conv."""
    n, z, h, w = x_nchw.shape
    oh, ow = h // 2, w // 2
    x = jnp.transpose(x_nchw, (0, 2, 3, 1))                    # NHWC
    xp = jnp.pad(x, ((0, 0), (1, 1), (1, 1), (0, 0)))
    cols = [xp[:, ki:ki + 2 * oh:2, kj:kj + 2 * ow:2, :]
            for ki in range(3) for kj in range(3)]
    return jnp.stack(cols, axis=3).reshape(n, oh * ow, 9 * z)


@functools.partial(jax.jit, static_argnames=("max_tile_rows",))
def ink_classifier_forward(x_nchw, params, *, max_tile_rows=512):
    """x_nchw: (N, z_dim, H, W) float32 (PyTorch layout). Returns (N,) probs."""
    wconv, bconv, wcls, bcls = params
    n, z, h, w = x_nchw.shape
    oh, ow = h // 2, w // 2
    p = oh * ow
    k, c = wconv.shape
    cp = ((c + 127) // 128) * 128             # lane-dense feature width

    # TODO(synk): move im2col into the kernel (row-band + halo DMA) at real
    # image sizes; the host-side version inflates HBM patch traffic ~9x.
    patches = _im2col_3x3_s2(x_nchw).astype(jnp.bfloat16)       # (N, P, K)

    tp = _pick_tile_rows(p, max_tile_rows)                      # divides P
    n_tiles = p // tp

    # Zero padding keeps the math exact: SiLU(0)=0 and padded wcls cols are 0.
    wconv_p = jnp.pad(wconv, ((0, 0), (0, cp - c))).astype(jnp.bfloat16)
    bconv_p = jnp.pad(bconv.reshape(1, c),
                      ((0, 0), (0, cp - c))).astype(jnp.float32)
    wcls_row = jnp.pad(wcls.reshape(1, c) * (1.0 / p),
                       ((0, 0), (0, cp - c))).astype(jnp.float32)
    bcls_s = bcls.reshape(1).astype(jnp.float32)

    out = pl.pallas_call(
        ink_kernel,
        out_shape=jax.ShapeDtypeStruct((n, 1, 128), jnp.float32),
        grid=(n, n_tiles),
        in_specs=[
            pl.BlockSpec((1, tp, k), lambda b, t: (b, t, 0)),     # patch tile
            pl.BlockSpec((k, cp), lambda b, t: (0, 0)),           # conv weight
            pl.BlockSpec((1, cp), lambda b, t: (0, 0)),           # conv bias
            pl.BlockSpec((1, cp), lambda b, t: (0, 0)),           # cls weight
            pl.BlockSpec(memory_space=pltpu.MemorySpace.SMEM),    # cls bias
        ],
        out_specs=pl.BlockSpec((1, 1, 128), lambda b, t: (b, 0, 0)),
        scratch_shapes=[pltpu.VMEM((1, cp), jnp.float32)],
        compiler_params=pltpu.CompilerParams(
            dimension_semantics=("parallel", "arbitrary")),
    )(patches, wconv_p, bconv_p, wcls_row, bcls_s)

    return out[:, 0, 0]  # .flatten() in the PyTorch module


if __name__ == "__main__":
    key = jax.random.PRNGKey(0)
    k1, k2, k3, kx = jax.random.split(key, 4)

    # small shapes consistent with the module: z_dim=4, subvolume_size=8
    n, z, s = 2, 4, 8
    h = w = 2 * s                  # forward sees 2*subvolume_size spatial
    c = 32                         # surrogate backbone_dim (stem width)
    k = 9 * z

    # deterministic synthetic parameters (no checkpoint load).
    # NOTE: with real PyTorch weights, the conv weight (Cout,Cin,kH,kW) must be
    # permuted to (kH,kW,Cin,Cout).reshape(9*Z, C) and the nn.Linear weight
    # (1, backbone_dim) transposed to (C, 1).
    wconv = jax.random.normal(k1, (k, c), jnp.float32) * 0.1
    bconv = jax.random.normal(k2, (c,), jnp.float32) * 0.01
    wcls = jax.random.normal(k3, (c, 1), jnp.float32) * 0.1
    bcls = jnp.zeros((1,), jnp.float32)
    params = (wconv, bconv, wcls, bcls)

    x = jax.random.normal(kx, (n, z, h, w), jnp.float32)        # NCHW

    # Small max_tile_rows so the toy shape exercises the multi-step
    # accumulate/finalize path (P=64 -> 4 reduction steps of 16 rows each).
    out = ink_classifier_forward(x, params, max_tile_rows=16)
    out = jax.block_until_ready(out)

    # pure-JAX f32 reference of the same surrogate forward
    def reference(xn, prm):
        wc, bc, wl, bl = prm
        pt = _im2col_3x3_s2(xn)
        ft = pt @ wc + bc
        ft = ft * jax.nn.sigmoid(ft)
        pooled = ft.mean(axis=1)
        return jax.nn.sigmoid(pooled @ wl + bl).reshape(-1)

    ref = reference(x, params)

    assert out.shape == (n,)
    assert bool(jnp.all((out >= 0.0) & (out <= 1.0)))
    assert np.allclose(np.asarray(out), np.asarray(ref), atol=2e-2)
    print("KERNEL_OK")
</pallas_src>

<mosaic_0001>
module attributes {stable_mosaic.version = 11 : i64} {
  func.func @ink_kernel(%arg0: i32, %arg1: i32, %arg2: memref<1x16x36xbf16, #tpu.memory_space<vmem>>, %arg3: memref<36x128xbf16, #tpu.memory_space<vmem>>, %arg4: memref<1x128xf32, #tpu.memory_space<vmem>>, %arg5: memref<1x128xf32, #tpu.memory_space<vmem>>, %arg6: memref<1xf32, #tpu.memory_space<smem>>, %arg7: memref<1x1x128xf32, #tpu.memory_space<vmem>>, %arg8: memref<1x128xf32, #tpu.memory_space<vmem>>) attributes {dimension_semantics = [#tpu.dimension_semantics<parallel>, #tpu.dimension_semantics<arbitrary>], iteration_bounds = array<i64: 2, 4>, scalar_prefetch = 0 : i64, scratch_operands = 1 : i64, tpu.core_type = #tpu.core_type<tc>, window_params = [{transform_indices = @transform_0, window_bounds = array<i64: 1, 16, 36>}, {pipeline_mode = #tpu.pipeline_mode<synchronous>, transform_indices = @transform_1, window_bounds = array<i64: 36, 128>}, {pipeline_mode = #tpu.pipeline_mode<synchronous>, transform_indices = @transform_2, window_bounds = array<i64: 1, 128>}, {pipeline_mode = #tpu.pipeline_mode<synchronous>, transform_indices = @transform_3, window_bounds = array<i64: 1, 128>}, {transform_indices = @transform_4, window_bounds = array<i64: 1>}, {transform_indices = @transform_5, window_bounds = array<i64: 1, 1, 128>}]} {
    %c0_i32 = arith.constant 0 : i32
    %0 = arith.cmpi eq, %arg1, %c0_i32 : i32
    %1 = arith.extui %0 : i1 to i32
    %c0_i32_0 = arith.constant 0 : i32
    %2 = arith.cmpi ne, %1, %c0_i32_0 : i32
    scf.if %2 {
      %cst_14 = arith.constant 0.000000e+00 : f32
      %24 = vector.broadcast %cst_14 : f32 to vector<1x128xf32>
      %c0_15 = arith.constant 0 : index
      %c0_16 = arith.constant 0 : index
      %25 = vector.load %arg8[%c0_15, %c0_16] : memref<1x128xf32, #tpu.memory_space<vmem>>, vector<1x128xf32>
      tpu.vector_store %arg8[%c0_15, %c0_16], %24 {strides = array<i32>} : memref<1x128xf32, #tpu.memory_space<vmem>>, vector<1x128xf32>,
    } else {
    }
    %c0 = arith.constant 0 : index
    %c0_1 = arith.constant 0 : index
    %c0_2 = arith.constant 0 : index
    %3 = vector.load %arg2[%c0, %c0_1, %c0_2] : memref<1x16x36xbf16, #tpu.memory_space<vmem>>, vector<1x16x36xbf16>
    %4 = vector.shape_cast %3 : vector<1x16x36xbf16> to vector<16x36xbf16>
    %c0_3 = arith.constant 0 : index
    %c0_4 = arith.constant 0 : index
    %5 = vector.load %arg3[%c0_3, %c0_4] : memref<36x128xbf16, #tpu.memory_space<vmem>>, vector<36x128xbf16>
    %cst = arith.constant dense<0.000000e+00> : vector<16x128xf32>
    %6 = tpu.matmul %4, %5, %cst {dimension_numbers = #tpu.dot_dimension_numbers<[1], [0], [0], [1], [0, 0, 1, 1], [], []>} : vector<16x36xbf16>, vector<36x128xbf16>, vector<16x128xf32> -> vector<16x128xf32>
    %c0_5 = arith.constant 0 : index
    %c0_6 = arith.constant 0 : index
    %7 = vector.load %arg4[%c0_5, %c0_6] : memref<1x128xf32, #tpu.memory_space<vmem>>, vector<1x128xf32>
    %8 = vector.broadcast %7 : vector<1x128xf32> to vector<16x128xf32>
    %9 = arith.addf %6, %8 : vector<16x128xf32>
    %10 = arith.negf %9 : vector<16x128xf32>
    %11 = math.exp %10 : vector<16x128xf32>
    %cst_7 = arith.constant 1.000000e+00 : f32
    %12 = vector.broadcast %cst_7 : f32 to vector<16x128xf32>
    %13 = arith.addf %12, %11 : vector<16x128xf32>
    %14 = arith.divf %12, %13 : vector<16x128xf32>
    %15 = arith.mulf %9, %14 : vector<16x128xf32>
    %c0_8 = arith.constant 0 : index
    %c0_9 = arith.constant 0 : index
    %16 = vector.load %arg8[%c0_8, %c0_9] : memref<1x128xf32, #tpu.memory_space<vmem>>, vector<1x128xf32>
    %cst_10 = arith.constant dense<0.000000e+00> : vector<128xf32>
    %17 = vector.multi_reduction <add>, %15, %cst_10 [0] : vector<16x128xf32> to vector<128xf32>
    %18 = vector.shape_cast %17 : vector<128xf32> to vector<1x128xf32>
    %19 = arith.addf %16, %18 : vector<1x128xf32>
    %c0_11 = arith.constant 0 : index
    %c0_12 = arith.constant 0 : index
    %20 = vector.load %arg8[%c0_11, %c0_12] : memref<1x128xf32, #tpu.memory_space<vmem>>, vector<1x128xf32>
    tpu.vector_store %arg8[%c0_11, %c0_12], %19 {strides = array<i32>} : memref<1x128xf32, #tpu.memory_space<vmem>>, vector<1x128xf32>,
    %c3_i32 = arith.constant 3 : i32
    %21 = arith.cmpi eq, %arg1, %c3_i32 : i32
    %22 = arith.extui %21 : i1 to i32
    %c0_i32_13 = arith.constant 0 : i32
    %23 = arith.cmpi ne, %22, %c0_i32_13 : i32
    scf.if %23 {
      %c0_14 = arith.constant 0 : index
      %c0_15 = arith.constant 0 : index
      %24 = vector.load %arg8[%c0_14, %c0_15] : memref<1x128xf32, #tpu.memory_space<vmem>>, vector<1x128xf32>
      %c0_16 = arith.constant 0 : index
      %c0_17 = arith.constant 0 : index
      %25 = vector.load %arg5[%c0_16, %c0_17] : memref<1x128xf32, #tpu.memory_space<vmem>>, vector<1x128xf32>
      %26 = arith.mulf %24, %25 : vector<1x128xf32>
      %cst_18 = arith.constant dense<0.000000e+00> : vector<1xf32>
      %27 = vector.multi_reduction <add>, %26, %cst_18 [1] : vector<1x128xf32> to vector<1xf32>
      %28 = vector.shape_cast %27 : vector<1xf32> to vector<1x1xf32>
      %c0_19 = arith.constant 0 : index
      %29 = memref.load %arg6[%c0_19] : memref<1xf32, #tpu.memory_space<smem>>
      %30 = vector.broadcast %29 : f32 to vector<1x1xf32>
      %31 = arith.addf %28, %30 : vector<1x1xf32>
      %32 = arith.negf %31 : vector<1x1xf32>
      %33 = math.exp %32 : vector<1x1xf32>
      %cst_20 = arith.constant 1.000000e+00 : f32
      %34 = vector.broadcast %cst_20 : f32 to vector<1x1xf32>
      %35 = arith.addf %34, %33 : vector<1x1xf32>
      %36 = arith.divf %34, %35 : vector<1x1xf32>
      %37 = vector.shape_cast %36 : vector<1x1xf32> to vector<1x1x1xf32>
      %38 = vector.shape_cast %37 : vector<1x1x1xf32> to vector<1x1x1xf32>
      %39 = vector.broadcast %38 : vector<1x1x1xf32> to vector<1x1x128xf32>
      %c0_21 = arith.constant 0 : index
      %c0_22 = arith.constant 0 : index
      %c0_23 = arith.constant 0 : index
      %40 = vector.load %arg7[%c0_21, %c0_22, %c0_23] : memref<1x1x128xf32, #tpu.memory_space<vmem>>, vector<1x1x128xf32>
      tpu.vector_store %arg7[%c0_21, %c0_22, %c0_23], %39 {strides = array<i32>} : memref<1x1x128xf32, #tpu.memory_space<vmem>>, vector<1x1x128xf32>,
    } else {
    }
    return
  }
  func.func @transform_0(%arg0: i32, %arg1: i32) -> (i32, i32, i32) {
    %c0_i32 = arith.constant 0 : i32
    %c0_i32_0 = arith.constant 0 : i32
    return %arg0, %arg1, %c0_i32 : i32, i32, i32
  }
  func.func @transform_1(%arg0: i32, %arg1: i32) -> (i32, i32) {
    %c0_i32 = arith.constant 0 : i32
    %c0_i32_0 = arith.constant 0 : i32
    %c0_i32_1 = arith.constant 0 : i32
    return %c0_i32, %c0_i32_0 : i32, i32
  }
  func.func @transform_2(%arg0: i32, %arg1: i32) -> (i32, i32) {
    %c0_i32 = arith.constant 0 : i32
    %c0_i32_0 = arith.constant 0 : i32
    %c0_i32_1 = arith.constant 0 : i32
    return %c0_i32, %c0_i32_0 : i32, i32
  }
  func.func @transform_3(%arg0: i32, %arg1: i32) -> (i32, i32) {
    %c0_i32 = arith.constant 0 : i32
    %c0_i32_0 = arith.constant 0 : i32
    %c0_i32_1 = arith.constant 0 : i32
    return %c0_i32, %c0_i32_0 : i32, i32
  }
  func.func @transform_4(%arg0: i32, %arg1: i32) -> i32 {
    %c0_i32 = arith.constant 0 : i32
    %c0_i32_0 = arith.constant 0 : i32
    return %c0_i32 : i32
  }
  func.func @transform_5(%arg0: i32, %arg1: i32) -> (i32, i32, i32) {
    %c0_i32 = arith.constant 0 : i32
    %c0_i32_0 = arith.constant 0 : i32
    %c0_i32_1 = arith.constant 0 : i32
    return %arg0, %c0_i32, %c0_i32_0 : i32, i32, i32
  }
}

</mosaic_0001>

<llo_original>
// kernel: ink_classifier_forward.1
$region0: #{ink_classifier_forward.1}
  #allocation0 [shape = 'u32[]', space=smem, size = 0x4, offset = 0x4, fixed_abs, tag = 'smem constant byte address 0x4 - core index']
  #allocation1 [shape = 'u32[144,128]{1,0:T(1,128)}', space=vmem, size = 0x12000, scoped, tag = 'internal scratch']
  #allocation2 [shape = 'f32[1,128]{1,0:T(1,128)}', space=vmem, size = 0x200, scoped, tag = 'scratch operand']
  #allocation3 [shape = 'f32[1]{0:T(128)S(6)}', space=smem, size = 0x200, scoped, tag = 'scoped memory for ink_classifier_forward.1']
  %s0 = inlined_call_operand.vmem [shape: bf16[2,64,36], index: 0, kind: input, shape index: {}]
  %s1 = inlined_call_operand.vmem [shape: bf16[36,128], index: 1, kind: input, shape index: {}]
  %s2 = inlined_call_operand.vmem [shape: f32[1,128], index: 2, kind: input, shape index: {}]
  %s3 = inlined_call_operand.vmem [shape: f32[1,128], index: 3, kind: input, shape index: {}]
  %s4 = inlined_call_operand.<no memory space> [shape: f32[1], index: 4, kind: input, shape index: {}]
  %s5 = inlined_call_operand.vmem [shape: f32[2,1,128], index: 5, kind: output, shape index: {}]
  %s6 = sld [smem:[#allocation0]]
  $region61: #{ink_classifier_forward.1} parent=0
    _
  %s8 = ssub.s32 1, %s6
  %s9 = scalar_select 0, %s8, %s6
  %10 = sst [smem:[#allocation3]] %s4
  loop: start=0, step=1, limit=10
  $region2: #{ink_classifier_forward.1} parent=0 // loop_pre_header
    _
  $region3: #{ink_classifier_forward.1} parent=0 // loop_header
    %s12 = sphi 0, %s16
    %p13 = scmp.ge.s32.totalorder %s12, 10
    %s19 = sphi 0, %s31
    %s20 = sphi 0, %s27
    %s21 = sphi 0, %s19
    %s22 = sphi 0, %s20
    %s23 = sphi 0, %s21
    %s24 = sphi 0, %s22
    %s36 = sphi 0, %s38
    %s39 = sphi 0, %s36
    %s40 = sphi 0, %s39
    %s56 = sphi 0, %s40
    %s60 = sphi 0, %s60
    %s62 = sphi 0, %s60
    %s63 = sphi 0, %s62
    %s77 = sphi 0, %s63
    %s81 = sphi 0, %s81
    %s83 = sphi 0, %s81
    %s84 = sphi 0, %s83
    %s98 = sphi 0, %s84
    %s102 = sphi 0, %s102
    %s104 = sphi 0, %s102
    %s105 = sphi 0, %s104
    %s119 = sphi 0, %s105
    %s123 = sphi 0, %s123
    %s125 = sphi 0, %s123
    %s126 = sphi 0, %s125
    %s140 = sphi 0, %s126
    %s146 = sphi 0, %s148
    %s149 = sphi 0, %s146
    %s150 = sphi 0, %s149
    %s166 = sphi 0, %s150
  $region4: #{ink_classifier_forward.1} parent=0 // loop_header_branch
    %15 = sbr.rel (%p13) target = $region8
  $region5: #{ink_classifier_forward.1} parent=0 // loop_body
    %s17 = ssub.s32 %s12, 1
    %s18 = ssub.s32 %s12, 2
    %s25 = sadd.s32 1, %s20
    %p26 = scmp.ge.s32.totalorder %s25, 4
    %s27 = scalar_select %p26, 0, %s25
    %s28 = sadd.s32 1, %s19
    %s29 = scalar_select %p26, %s28, %s19
    %p30 = scmp.ge.s32.totalorder %s29, 2
    %s31 = scalar_select %p30, 0, %s29
    %s32 = ssub.s32 %s19, %s31
    %s33 = ssub.s32 %s20, %s27
    %s34 = sor.u32 %s32, %s33
    %p35 = scmp.eq.s32.totalorder %s34, 0
    %s37 = sadd.s32 %s36, 1
    %s38 = scalar_select %p35, %s36, %s37
    %p41 = pneg %p35
    %p42 = scmp.eq.s32.totalorder %s12, 7
    %p43 = por %p41, %p42
    %p44 = scmp.ne.s32.totalorder %s36, %s39
    %p45 = scmp.eq.s32.totalorder %s12, 0
    %p46 = por %p44, %p45
    %p47 = scmp.ne.s32.totalorder %s36, %s39
    %p48 = scmp.eq.s32.totalorder %s17, 7
    %p49 = por %p47, %p48
    %p50 = scmp.ne.s32.totalorder %s39, %s40
    %p51 = scmp.eq.s32.totalorder %s17, 0
    %p52 = por %p50, %p51
    %p53 = scmp.ne.s32.totalorder %s39, %s40
    %p54 = scmp.eq.s32.totalorder %s18, 7
    %p55 = por %p53, %p54
    %p57 = scmp.ne.s32.totalorder %s40, %s56
    %p58 = scmp.eq.s32.totalorder %s18, 0
    %p59 = por %p57, %p58
    %s61 = sadd.s32 %s60, 1
    %p64 = scmp.eq.s32.totalorder %s12, 7
    %p65 = scmp.ne.s32.totalorder %s60, %s62
    %p66 = scmp.eq.s32.totalorder %s12, 0
    %p67 = por %p65, %p66
    %p68 = scmp.ne.s32.totalorder %s60, %s62
    %p69 = scmp.eq.s32.totalorder %s17, 7
    %p70 = por %p68, %p69
    %p71 = scmp.ne.s32.totalorder %s62, %s63
    %p72 = scmp.eq.s32.totalorder %s17, 0
    %p73 = por %p71, %p72
    %p74 = scmp.ne.s32.totalorder %s62, %s63
    %p75 = scmp.eq.s32.totalorder %s18, 7
    %p76 = por %p74, %p75
    %p78 = scmp.ne.s32.totalorder %s63, %s77
    %p79 = scmp.eq.s32.totalorder %s18, 0
    %p80 = por %p78, %p79
    %s82 = sadd.s32 %s81, 1
    %p85 = scmp.eq.s32.totalorder %s12, 7
    %p86 = scmp.ne.s32.totalorder %s81, %s83
    %p87 = scmp.eq.s32.totalorder %s12, 0
    %p88 = por %p86, %p87
    %p89 = scmp.ne.s32.totalorder %s81, %s83
    %p90 = scmp.eq.s32.totalorder %s17, 7
    %p91 = por %p89, %p90
    %p92 = scmp.ne.s32.totalorder %s83, %s84
    %p93 = scmp.eq.s32.totalorder %s17, 0
    %p94 = por %p92, %p93
    %p95 = scmp.ne.s32.totalorder %s83, %s84
    %p96 = scmp.eq.s32.totalorder %s18, 7
    %p97 = por %p95, %p96
    %p99 = scmp.ne.s32.totalorder %s84, %s98
    %p100 = scmp.eq.s32.totalorder %s18, 0
    %p101 = por %p99, %p100
    %s103 = sadd.s32 %s102, 1
    %p106 = scmp.eq.s32.totalorder %s12, 7
    %p107 = scmp.ne.s32.totalorder %s102, %s104
    %p108 = scmp.eq.s32.totalorder %s12, 0
    %p109 = por %p107, %p108
    %p110 = scmp.ne.s32.totalorder %s102, %s104
    %p111 = scmp.eq.s32.totalorder %s17, 7
    %p112 = por %p110, %p111
    %p113 = scmp.ne.s32.totalorder %s104, %s105
    %p114 = scmp.eq.s32.totalorder %s17, 0
    %p115 = por %p113, %p114
    %p116 = scmp.ne.s32.totalorder %s104, %s105
    %p117 = scmp.eq.s32.totalorder %s18, 7
    %p118 = por %p116, %p117
    %p120 = scmp.ne.s32.totalorder %s105, %s119
    %p121 = scmp.eq.s32.totalorder %s18, 0
    %p122 = por %p120, %p121
    %s124 = sadd.s32 %s123, 1
    %p127 = scmp.eq.s32.totalorder %s12, 7
    %p128 = scmp.ne.s32.totalorder %s123, %s125
    %p129 = scmp.eq.s32.totalorder %s12, 0
    %p130 = por %p128, %p129
    %p131 = scmp.ne.s32.totalorder %s123, %s125
    %p132 = scmp.eq.s32.totalorder %s17, 7
    %p133 = por %p131, %p132
    %p134 = scmp.ne.s32.totalorder %s125, %s126
    %p135 = scmp.eq.s32.totalorder %s17, 0
    %p136 = por %p134, %p135
    %p137 = scmp.ne.s32.totalorder %s125, %s126
    %p138 = scmp.eq.s32.totalorder %s18, 7
    %p139 = por %p137, %p138
    %p141 = scmp.ne.s32.totalorder %s126, %s140
    %p142 = scmp.eq.s32.totalorder %s18, 0
    %p143 = por %p141, %p142
    %s144 = ssub.s32 %s19, %s31
    %p145 = scmp.eq.s32.totalorder %s144, 0
    %s147 = sadd.s32 %s146, 1
    %s148 = scalar_select %p145, %s146, %s147
    %p151 = pneg %p145
    %p152 = scmp.eq.s32.totalorder %s12, 7
    %p153 = por %p151, %p152
    %p154 = scmp.ne.s32.totalorder %s146, %s149
    %p155 = scmp.eq.s32.totalorder %s12, 0
    %p156 = por %p154, %p155
    %p157 = scmp.ne.s32.totalorder %s146, %s149
    %p158 = scmp.eq.s32.totalorder %s17, 7
    %p159 = por %p157, %p158
    %p160 = scmp.ne.s32.totalorder %s149, %s150
    %p161 = scmp.eq.s32.totalorder %s17, 0
    %p162 = por %p160, %p161
    %p163 = scmp.ne.s32.totalorder %s149, %s150
    %p164 = scmp.eq.s32.totalorder %s18, 7
    %p165 = por %p163, %p164
    %p167 = scmp.ne.s32.totalorder %s150, %s166
    %p168 = scmp.eq.s32.totalorder %s18, 0
    %p169 = por %p167, %p168
    %p170 = scmp.le.s32.totalorder 1, %s12
    %p171 = scmp.lt.s32.totalorder %s12, 9
    %p172 = pnand %p170, %p171
    %p173 = pneg %p172
    // Predicated region
    $region9: #{ink_classifier_forward.1} parent=5 // pred_check
      _
    $region10: #{ink_classifier_forward.1} parent=5 // pred_check_branch
      %175 = sbr.rel (%p172) target = $region12
    $region11: #{ink_classifier_forward.1} parent=5 // pred_region
      %s176 = ssub.s32 %s12, 1
      // Predicated region
      $region13: #{ink_classifier_forward.1} parent=11 // pred_check
        %p177 = pneg %p73
      $region14: #{ink_classifier_forward.1} parent=11 // pred_check_branch
        %179 = sbr.rel (%p177) target = $region16
      $region15: #{ink_classifier_forward.1} parent=11 // pred_region
        _
      $region16: #{ink_classifier_forward.1} parent=11 // pred_fallthru
        _
      // Predicated region
      $region17: #{ink_classifier_forward.1} parent=11 // pred_check
        %p180 = pneg %p94
      $region18: #{ink_classifier_forward.1} parent=11 // pred_check_branch
        %182 = sbr.rel (%p180) target = $region20
      $region19: #{ink_classifier_forward.1} parent=11 // pred_region
        _
      $region20: #{ink_classifier_forward.1} parent=11 // pred_fallthru
        _
      // Predicated region
      $region21: #{ink_classifier_forward.1} parent=11 // pred_check
        %p183 = pneg %p115
      $region22: #{ink_classifier_forward.1} parent=11 // pred_check_branch
        %185 = sbr.rel (%p183) target = $region24
      $region23: #{ink_classifier_forward.1} parent=11 // pred_region
        _
      $region24: #{ink_classifier_forward.1} parent=11 // pred_fallthru
        _
      // Predicated region
      $region25: #{ink_classifier_forward.1} parent=11 // pred_check
        %p186 = pneg %p136
      $region26: #{ink_classifier_forward.1} parent=11 // pred_check_branch
        %188 = sbr.rel (%p186) target = $region28
      $region27: #{ink_classifier_forward.1} parent=11 // pred_region
        _
      $region28: #{ink_classifier_forward.1} parent=11 // pred_fallthru
        _
    $region12: #{ink_classifier_forward.1} parent=5 // pred_fallthru
      _
    %p189 = scmp.lt.s32.totalorder %s12, 8
    // Predicated region
    $region29: #{ink_classifier_forward.1} parent=5 // pred_check
      %p190 = pneg %p189
    $region30: #{ink_classifier_forward.1} parent=5 // pred_check_branch
      %192 = sbr.rel (%p190) target = $region32
    $region31: #{ink_classifier_forward.1} parent=5 // pred_region
      // Predicated region
      $region33: #{ink_classifier_forward.1} parent=31 // pred_check
        %p193 = pneg %p46
      $region34: #{ink_classifier_forward.1} parent=31 // pred_check_branch
        %195 = sbr.rel (%p193) target = $region36
      $region35: #{ink_classifier_forward.1} parent=31 // pred_region
        %s196 = smul.u32 2, %s20
        %p197 = scmp.lt.s32.totalorder %s19, 1
        %s198 = scalar_select %p197, %s19, 1
        %p199 = scmp.lt.s32.totalorder %s196, 7
        %s200 = scalar_select %p199, %s196, 7
        %s201 = smul.addr %s198, 8
        %s202 = sadd.s32 %s200, %s201
        %s203 = smul.addr %s202, 4
        %s204 = scalar_lea.vmem %s0, %s203
        %s205 = smul.u32 2, %s20
      $region36: #{ink_classifier_forward.1} parent=31 // pred_fallthru
        _
    $region32: #{ink_classifier_forward.1} parent=5 // pred_fallthru
      _
    %p206 = scmp.le.s32.totalorder 1, %s12
    %p207 = scmp.lt.s32.totalorder %s12, 9
    %p208 = pnand %p206, %p207
    %p209 = pneg %p208
    // Predicated region
    $region37: #{ink_classifier_forward.1} parent=5 // pred_check
      _
    $region38: #{ink_classifier_forward.1} parent=5 // pred_check_branch
      %211 = sbr.rel (%p208) target = $region40
    $region39: #{ink_classifier_forward.1} parent=5 // pred_region
      %s212 = ssub.s32 %s12, 1
      %s213 = smul.u32 2, %s22
      %p214 = scmp.lt.s32.totalorder %s21, 1
      %s215 = scalar_select %p214, %s21, 1
      %p216 = scmp.lt.s32.totalorder %s213, 7
      %s217 = scalar_select %p216, %s213, 7
      %s218 = smul.addr %s215, 8
      %s219 = sadd.s32 %s217, %s218
      %s220 = smul.addr %s219, 4
      %s221 = scalar_lea.vmem %s0, %s220
      %p222 = pneg %p52
      %p223 = pneg %p49
      %p224 = pneg %p73
      %p225 = pneg %p70
      %p226 = pneg %p94
      %p227 = pneg %p91
      %p228 = pneg %p115
      %p229 = pneg %p112
      %p230 = pneg %p136
      %p231 = pneg %p133
      %p232 = pneg %p162
      %p233 = pneg %p159
      %p234 = scmp.lt.s32.totalorder %s21, 1
      %s235 = scalar_select %p234, %s21, 1
      %s236 = scalar_lea.vmem %s5, %s235
      %s237 = smul.u32 2, %s22
      %p238 = scmp.lt.s32.totalorder %s21, 1
      %s239 = scalar_select %p238, %s21, 1
      %p240 = scmp.lt.s32.totalorder %s237, 7
      %s241 = scalar_select %p240, %s237, 7
      %s242 = smul.addr %s239, 8
      %s243 = sadd.s32 %s241, %s242
      %s244 = smul.addr %s243, 4
      %s245 = scalar_lea.vmem %s0, %s244
      %s246 = smul.u32 2, %s22
      %p247 = scmp.lt.s32.totalorder %s21, 1
      %s248 = scalar_select %p247, %s21, 1
      %s249 = scalar_lea.vmem %s5, %s248
      %p251 = scmp.eq.s32.totalorder %s22, 0
      // Predicated region
      $region41: #{ink_classifier_forward.1} parent=39 // pred_check
        %p252 = pneg %p251
      $region42: #{ink_classifier_forward.1} parent=39 // pred_check_branch
        %254 = sbr.rel (%p252) target = $region44
      $region43: #{ink_classifier_forward.1} parent=39 // pred_region
        %255 = vst [vmem:[#allocation2] sm:$0x1] 0.0
      $region44: #{ink_classifier_forward.1} parent=39 // pred_fallthru
        _
      %v256 = vld [vmem:[%s245] sm:$0xf]
      %v257 = vld [vmem:[%s245 + $0x4] sm:$0xf]
      %v258 = vld [vmem:[%s1] sm:$0xf]
      %v259 = vld [vmem:[%s1 + $0x4] sm:$0xf]
      %v260 = vld [vmem:[%s1 + $0x8] sm:$0xf]
      %v261 = vld [vmem:[%s1 + $0xc] sm:$0xf]
      %v262 = vld [vmem:[%s1 + $0x10] sm:$0x3]
      %v263 = vld [vmem:[%s2] sm:$0x1]
      %v265 = vlaneseq
      %v266 = vshrl.u32 %v265, 7
      %v267 = vsub.s32 0, %v266
      %v268 = vrot.slane %v263, %v267
      %v272 = vunpack.c.l.b16 %v256
      %v273 = vunpack.c.l.b16 %v257
      %v274 = vpack.c.b16 %v273, %v272
      %v280 = vunpack.c.l.b16 %v258
      %v281 = vunpack.c.l.b16 %v259
      %v282 = vunpack.c.l.b16 %v260
      %v283 = vunpack.c.l.b16 %v261
      %v284 = vunpack.c.l.b16 %v262
      %v285 = vpack.c.b16 %v281, %v280
      %v286 = vpack.c.b16 %v283, %v282
      %v287 = vpack.c.b16 %v284, %v284
      %vm290 = vcmask 293888
      %v292 = vsel %vm290, %v274, 0
      %vm294 = vcmask 1041408
      %v296 = vsel %vm294, %v287, 0
      %298 = vmatprep.subr.bf16.mxu0 0
      %299 = vmatpush1.bf16.msra.mxu0 %v285
      %300 = vmatprep.subr.bf16.mxu0 0
      %301 = vmatpush1.bf16.msra.mxu0 %v286
      %302 = vmatprep.subr.bf16.mxu0 0
      %303 = vmatpush1.bf16.msra.mxu0 %v296
      %304 = vmatprep.subr.bf16.mxu0 0
      %305 = vmatpush1.bf16.msra.mxu0 0
      %306 = vmatprep.subr.bf16.mxu0 0
      %307 = vmatpush1.bf16.msra.mxu0 0
      %308 = vmatprep.subr.bf16.mxu0 0
      %309 = vmatpush1.bf16.msra.mxu0 0
      %310 = vmatprep.subr.bf16.mxu0 0
      %311 = vmatpush1.bf16.msra.mxu0 0
      %312 = vmatprep.subr.bf16.mxu0 0
      %313 = vmatpush1.bf16.msra.mxu0 0
      %314 = vmatprep.subr.bf16.mxu0 0
      %315 = vmatpush1.bf16.msra.mxu0 0
      %316 = vmatprep.subr.bf16.mxu0 0
      %317 = vmatpush1.bf16.msra.mxu0 0
      %318 = vmatprep.subr.bf16.mxu0 0
      %319 = vmatpush1.bf16.msra.mxu0 0
      %320 = vmatprep.subr.bf16.mxu0 0
      %321 = vmatpush1.bf16.msra.mxu0 0
      %322 = vmatprep.subr.bf16.mxu0 0
      %323 = vmatpush1.bf16.msra.mxu0 0
      %324 = vmatprep.subr.bf16.mxu0 0
      %325 = vmatpush1.bf16.msra.mxu0 0
      %326 = vmatprep.subr.bf16.mxu0 0
      %327 = vmatpush1.bf16.msra.mxu0 0
      %328 = vmatprep.subr.bf16.mxu0 0
      %329 = vmatpush1.bf16.msra.mxu0 0
      %330 = vmatprep.mubr.bf16.mxu0 0
      %331 = vmatmul.mubr.bf16.gmra.mrb[0].mxu0 %v292
      %v332 = vpop.f32.mrb[0].mxu0
      %v333 = vadd.f32 %v268, %v332
      %v334 = vpop.f32.mrb[0].mxu0
      %v335 = vpop.f32.mrb[0].mxu0
      %v336 = vadd.f32 %v268, %v335
      %v337 = vpop.f32.mrb[0].mxu0
      %338 = vdwg.mxu0
      %v339 = vxor.u32 %v333, 2147483648
      %v340 = vxor.u32 %v336, 2147483648
      %v341 = vmul.f32 %v339, 1.442695
      %v342 = vpow.pop %v341
      %v343 = vmul.f32 %v340, 1.442695
      %v344 = vpow.pop %v343
      %v345 = vadd.f32 %v342, 1.0
      %v346 = vadd.f32 %v344, 1.0
      %v347 = vrcp.pop %v345
      %v348 = vmul.f32 1.0, %v347
      %v349 = vrcp.pop %v346
      %v350 = vmul.f32 1.0, %v349
      %v351 = vmul.f32 %v333, %v348
      %v352 = vmul.f32 %v336, %v350
      %v353 = vld [vmem:[#allocation2] sm:$0x1]
      %v354 = vadd.f32 %v351, %v352
      %v355 = vrot.slane %v354, 4
      %v356 = vadd.f32 %v354, %v355
      %v357 = vrot.slane %v356, 2
      %v358 = vadd.f32 %v356, %v357
      %v359 = vrot.slane %v358, 1
      %v360 = vadd.f32 %v358, %v359
      %v361 = vadd.f32 %v353, %v360
      %362 = vst [vmem:[#allocation2] sm:$0x1] %v361
      %p363 = scmp.eq.s32.totalorder %s22, 3
      // Predicated region
      $region45: #{ink_classifier_forward.1} parent=39 // pred_check
        %p364 = pneg %p363
      $region46: #{ink_classifier_forward.1} parent=39 // pred_check_branch
        %366 = sbr.rel (%p364) target = $region48
      $region47: #{ink_classifier_forward.1} parent=39 // pred_region
        %v367 = vld [vmem:[#allocation2] sm:$0x1]
        %v368 = vld [vmem:[%s3] sm:$0x1]
        %v369 = vmul.f32 %v367, %v368
        %vm370 = vcmask 1040384
        %v371 = vsel %vm370, %v369, 0.0
        %372 = vadd.xlane.f32.xlu0 %v371
        %v373 = vpop.xlane.xlu0 %372
        %s374 = sld [smem:[#allocation3]]
        %v375 = vstv %s374
        %v376 = vadd.f32 %v373, %v375
        %v377 = vxor.u32 %v376, 2147483648
        %v378 = vmul.f32 %v377, 1.442695
        %v379 = vpow.pop %v378
        %v380 = vadd.f32 %v379, 1.0
        %v381 = vrcp.pop %v380
        %v382 = vmul.f32 1.0, %v381
        %383 = vst [vmem:[%s249] sm:$0x1] %v382
      $region48: #{ink_classifier_forward.1} parent=39 // pred_fallthru
        _
      %p384 = scmp.lt.s32.totalorder %s21, 1
      %s385 = scalar_select %p384, %s21, 1
      %s386 = scalar_lea.vmem %s5, %s385
      // Predicated region
      $region49: #{ink_classifier_forward.1} parent=39 // pred_check
        %p387 = pneg %p159
      $region50: #{ink_classifier_forward.1} parent=39 // pred_check_branch
        %389 = sbr.rel (%p387) target = $region52
      $region51: #{ink_classifier_forward.1} parent=39 // pred_region
        _
      $region52: #{ink_classifier_forward.1} parent=39 // pred_fallthru
        _
    $region40: #{ink_classifier_forward.1} parent=5 // pred_fallthru
      _
    %p390 = scmp.le.s32.totalorder 2, %s12
    // Predicated region
    $region53: #{ink_classifier_forward.1} parent=5 // pred_check
      %p391 = pneg %p390
    $region54: #{ink_classifier_forward.1} parent=5 // pred_check_branch
      %393 = sbr.rel (%p391) target = $region56
    $region55: #{ink_classifier_forward.1} parent=5 // pred_region
      %s394 = ssub.s32 %s12, 2
      // Predicated region
      $region57: #{ink_classifier_forward.1} parent=55 // pred_check
        %p395 = pneg %p165
      $region58: #{ink_classifier_forward.1} parent=55 // pred_check_branch
        %397 = sbr.rel (%p395) target = $region60
      $region59: #{ink_classifier_forward.1} parent=55 // pred_region
        %p398 = scmp.lt.s32.totalorder %s23, 1
        %s399 = scalar_select %p398, %s23, 1
        %s400 = scalar_lea.vmem %s5, %s399
      $region60: #{ink_classifier_forward.1} parent=55 // pred_fallthru
        _
    $region56: #{ink_classifier_forward.1} parent=5 // pred_fallthru
      _
  $region6: #{ink_classifier_forward.1} parent=0 // loop_footer
    %s16 = sadd.s32 1, %s12
  $region7: #{ink_classifier_forward.1} parent=0 // loop_footer_branch
    %11 = sbr.rel target = $region3
  $region8: #{ink_classifier_forward.1} parent=0 // loop_exit
    _

</llo_original>
